<compile_context>
chip_gen: v7x
topology: tpu7x:2x2x1
jax: 0.10.0
libtpu: 0.0.40
codegen_flags: <defaults>
</compile_context>

<pallas_src>
import jax
import jax.numpy as jnp
from jax import lax
from jax.experimental import pallas as pl
from jax.experimental.pallas import tpu as pltpu

NUM_INPUTS = 11     # Hopper-v4 observation_space.shape[0]
NUM_OUTPUTS = 3     # Hopper-v4 action_space.shape[0]
HIDDEN = 64
PACK = 2 * HIDDEN   # 128 lanes: critic half = cols [0:64], actor half = cols [64:128]
STD_INIT = 0.0      # module default: log_std = ones(1, num_outputs) * 0.0
MAX_TILE_B = 512    # batch-tile rows (sublane multiple, fits VMEM comfortably)


def _round_up(n, m):
    return ((n + m - 1) // m) * m


def _actor_critic_kernel(x_ref, w_ref, b_ref, out_ref):
    """Fused actor+critic MLP (one batch tile).

    x_ref  : (TB, PACK)       zero-padded observations (obs in cols [0:11]).
    w_ref  : (4, PACK, PACK)  block-diagonal packed weights (VMEM-resident).
    b_ref  : (4, 1, PACK)     packed biases.
    out_ref: (TB, PACK)       cols [0:3] = mu, col [3] = value, rest = 0.
    """
    x = x_ref[...]                                                    # (TB, 128)

    # Layers 1 & 2: both stacks share Linear->ReLU structure, so packed
    # block-diagonal weights let a single lane-full matmul handle both.
    h = jnp.maximum(
        jnp.dot(x, w_ref[0], preferred_element_type=jnp.float32) + b_ref[0], 0.0)
    h = jnp.maximum(
        jnp.dot(h, w_ref[1], preferred_element_type=jnp.float32) + b_ref[1], 0.0)

    # Layer 3: critic's final Linear (col 0 = value, NO ReLU) packed with the
    # actor's third Linear+ReLU (cols 64:128).  ReLU only the actor half via a
    # lane-index select (cheap VPU op, no narrow slices / masked stores).
    h = jnp.dot(h, w_ref[2], preferred_element_type=jnp.float32) + b_ref[2]
    col = lax.broadcasted_iota(jnp.int32, h.shape, 1)
    h = jnp.where(col >= HIDDEN, jnp.maximum(h, 0.0), h)

    # Layer 4: actor head -> mu in cols [0:3]; the value (pre-ReLU col 0 of h)
    # is passed through via an identity entry baked into w_ref[3] so it lands
    # in col [3].  One unmasked lane-dense (TB, 128) store.
    out_ref[...] = (
        jnp.dot(h, w_ref[3], preferred_element_type=jnp.float32) + b_ref[3])


@jax.jit
def actor_critic_forward(x, w_slab, b_slab, log_std):
    """Returns (mu, std, value) — the Normal(mu, std) parameters and critic value."""
    b = x.shape[0]
    # Batch tiling: pad to a sublane multiple, tile at <= MAX_TILE_B rows.
    tile_b = min(MAX_TILE_B, _round_up(b, 8))
    padded_b = _round_up(b, tile_b)
    grid_b = padded_b // tile_b

    x_pad = jnp.pad(x.astype(jnp.float32),
                    ((0, padded_b - b), (0, PACK - NUM_INPUTS)))

    out = pl.pallas_call(
        _actor_critic_kernel,
        out_shape=jax.ShapeDtypeStruct((padded_b, PACK), jnp.float32),
        grid_spec=pltpu.PrefetchScalarGridSpec(
            num_scalar_prefetch=0,
            grid=(grid_b,),
            in_specs=[
                pl.BlockSpec((tile_b, PACK), lambda i: (i, 0)),
                # Constant block index -> weight/bias slabs stay VMEM-resident.
                pl.BlockSpec((4, PACK, PACK), lambda i: (0, 0, 0)),
                pl.BlockSpec((4, 1, PACK), lambda i: (0, 0, 0)),
            ],
            out_specs=pl.BlockSpec((tile_b, PACK), lambda i: (i, 0)),
        ),
        compiler_params=pltpu.CompilerParams(
            dimension_semantics=("parallel",)),
    )(x_pad, w_slab, b_slab)

    mu = out[:b, :NUM_OUTPUTS]
    value = out[:b, NUM_OUTPUTS:NUM_OUTPUTS + 1]
    # std = log_std.exp().expand_as(mu) is input-independent -> outside kernel.
    std = jnp.broadcast_to(jnp.exp(log_std), mu.shape)
    return mu, std, value


def pack_params(p):
    """Fold per-layer weights/biases into one weight slab + one bias slab.

    Done once at parameter-prep time (numerically exact: zero blocks
    contribute nothing).
    """
    w = jnp.zeros((4, PACK, PACK), jnp.float32)
    b = jnp.zeros((4, 1, PACK), jnp.float32)
    # layer 1: obs(11) -> [critic hidden | actor hidden]  (rows 11:128 zero,
    # matching the zero-padded input columns)
    w = w.at[0, :NUM_INPUTS, :HIDDEN].set(p["cw1"])
    w = w.at[0, :NUM_INPUTS, HIDDEN:].set(p["aw1"])
    b = b.at[0, 0, :HIDDEN].set(p["cb1"][0])
    b = b.at[0, 0, HIDDEN:].set(p["ab1"][0])
    # layer 2: block-diagonal
    w = w.at[1, :HIDDEN, :HIDDEN].set(p["cw2"])
    w = w.at[1, HIDDEN:, HIDDEN:].set(p["aw2"])
    b = b.at[1, 0, :HIDDEN].set(p["cb2"][0])
    b = b.at[1, 0, HIDDEN:].set(p["ab2"][0])
    # layer 3: critic head -> col 0 (value), actor hidden -> cols 64:128
    w = w.at[2, :HIDDEN, 0:1].set(p["cw3"])
    w = w.at[2, HIDDEN:, HIDDEN:].set(p["aw3"])
    b = b.at[2, 0, 0].set(p["cb3"][0, 0])
    b = b.at[2, 0, HIDDEN:].set(p["ab3"][0])
    # layer 4: actor head -> cols 0:3 (mu); identity pass-through of value
    # (pre-ReLU col 0) into output col 3
    w = w.at[3, HIDDEN:, :NUM_OUTPUTS].set(p["aw4"])
    w = w.at[3, 0, NUM_OUTPUTS].set(1.0)
    b = b.at[3, 0, :NUM_OUTPUTS].set(p["ab4"][0])
    return w, b


def init_params(key):
    """Deterministic init matching init_weights: W ~ N(0, 0.1), b = 0.1, log_std = 0."""
    def linear(key, fan_in, fan_out):
        w = 0.1 * jax.random.normal(key, (fan_in, fan_out), dtype=jnp.float32)
        b = jnp.full((1, fan_out), 0.1, dtype=jnp.float32)
        return w, b

    keys = jax.random.split(key, 7)
    params = {}
    # critic: in -> hidden -> hidden -> 1
    params["cw1"], params["cb1"] = linear(keys[0], NUM_INPUTS, HIDDEN)
    params["cw2"], params["cb2"] = linear(keys[1], HIDDEN, HIDDEN)
    params["cw3"], params["cb3"] = linear(keys[2], HIDDEN, 1)
    # actor: in -> hidden -> hidden -> hidden -> out
    params["aw1"], params["ab1"] = linear(keys[3], NUM_INPUTS, HIDDEN)
    params["aw2"], params["ab2"] = linear(keys[4], HIDDEN, HIDDEN)
    params["aw3"], params["ab3"] = linear(keys[5], HIDDEN, HIDDEN)
    params["aw4"], params["ab4"] = linear(keys[6], HIDDEN, NUM_OUTPUTS)
    # log_std = ones(1, num_outputs) * std  (std = 0.0)
    params["log_std"] = jnp.full((1, NUM_OUTPUTS), STD_INIT, dtype=jnp.float32)
    return params


def _reference_forward(x, p):
    """Pure-JAX reference mirroring the PyTorch module (for correctness check)."""
    relu = lambda t: jnp.maximum(t, 0.0)
    h = relu(x @ p["cw1"] + p["cb1"])
    h = relu(h @ p["cw2"] + p["cb2"])
    value = h @ p["cw3"] + p["cb3"]
    a = relu(x @ p["aw1"] + p["ab1"])
    a = relu(a @ p["aw2"] + p["ab2"])
    a = relu(a @ p["aw3"] + p["ab3"])
    mu = a @ p["aw4"] + p["ab4"]
    std = jnp.broadcast_to(jnp.exp(p["log_std"]), mu.shape)
    return mu, std, value


if __name__ == "__main__":
    key = jax.random.PRNGKey(0)
    pkey, xkey = jax.random.split(key)
    params = init_params(pkey)
    w_slab, b_slab = pack_params(params)   # one-time packing, outside the jit

    batch = 16  # one observation per env (16 envs in the reference script)
    x = jax.random.normal(xkey, (batch, NUM_INPUTS), dtype=jnp.float32)

    mu, std, value = actor_critic_forward(x, w_slab, b_slab, params["log_std"])
    jax.block_until_ready((mu, std, value))

    # correctness check against pure-JAX reference
    mu_r, std_r, value_r = _reference_forward(x, params)
    assert mu.shape == (batch, NUM_OUTPUTS)
    assert std.shape == (batch, NUM_OUTPUTS)
    assert value.shape == (batch, 1)
    assert jnp.allclose(mu, mu_r, atol=1e-5, rtol=1e-5)
    assert jnp.allclose(std, std_r, atol=1e-5, rtol=1e-5)
    assert jnp.allclose(value, value_r, atol=1e-5, rtol=1e-5)

    # TODO(synk): torch.distributions.Normal object itself is not representable
    # as an array; the kernel returns its (mu, std) parameters instead.
    print("KERNEL_OK")
</pallas_src>

<mosaic_0001>
module attributes {stable_mosaic.version = 11 : i64} {
  func.func @_actor_critic_kernel(%arg0: i32, %arg1: memref<16x128xf32, #tpu.memory_space<vmem>>, %arg2: memref<4x128x128xf32, #tpu.memory_space<vmem>>, %arg3: memref<4x1x128xf32, #tpu.memory_space<vmem>>, %arg4: memref<16x128xf32, #tpu.memory_space<vmem>>) attributes {dimension_semantics = [#tpu.dimension_semantics<parallel>], iteration_bounds = array<i64: 1>, scalar_prefetch = 0 : i64, scratch_operands = 0 : i64, tpu.core_type = #tpu.core_type<tc>, window_params = [{transform_indices = @transform_0, window_bounds = array<i64: 16, 128>}, {pipeline_mode = #tpu.pipeline_mode<synchronous>, transform_indices = @transform_1, window_bounds = array<i64: 4, 128, 128>}, {pipeline_mode = #tpu.pipeline_mode<synchronous>, transform_indices = @transform_2, window_bounds = array<i64: 4, 1, 128>}, {transform_indices = @transform_3, window_bounds = array<i64: 16, 128>}]} {
    %c0 = arith.constant 0 : index
    %c0_0 = arith.constant 0 : index
    %0 = vector.load %arg1[%c0, %c0_0] : memref<16x128xf32, #tpu.memory_space<vmem>>, vector<16x128xf32>
    %c0_1 = arith.constant 0 : index
    %c0_2 = arith.constant 0 : index
    %c0_3 = arith.constant 0 : index
    %1 = vector.load %arg2[%c0_1, %c0_2, %c0_3] : memref<4x128x128xf32, #tpu.memory_space<vmem>>, vector<1x128x128xf32>
    %2 = vector.shape_cast %1 : vector<1x128x128xf32> to vector<128x128xf32>
    %cst = arith.constant dense<0.000000e+00> : vector<16x128xf32>
    %3 = tpu.matmul %0, %2, %cst {dimension_numbers = #tpu.dot_dimension_numbers<[1], [0], [0], [1], [0, 0, 1, 1], [], []>} : vector<16x128xf32>, vector<128x128xf32>, vector<16x128xf32> -> vector<16x128xf32>
    %c0_4 = arith.constant 0 : index
    %c0_5 = arith.constant 0 : index
    %c0_6 = arith.constant 0 : index
    %4 = vector.load %arg3[%c0_4, %c0_5, %c0_6] : memref<4x1x128xf32, #tpu.memory_space<vmem>>, vector<1x1x128xf32>
    %5 = vector.shape_cast %4 : vector<1x1x128xf32> to vector<1x128xf32>
    %6 = vector.broadcast %5 : vector<1x128xf32> to vector<16x128xf32>
    %7 = arith.addf %3, %6 : vector<16x128xf32>
    %cst_7 = arith.constant 0.000000e+00 : f32
    %8 = vector.broadcast %cst_7 : f32 to vector<16x128xf32>
    %9 = arith.maximumf %7, %8 : vector<16x128xf32>
    %c1 = arith.constant 1 : index
    %c0_8 = arith.constant 0 : index
    %c0_9 = arith.constant 0 : index
    %10 = vector.load %arg2[%c1, %c0_8, %c0_9] : memref<4x128x128xf32, #tpu.memory_space<vmem>>, vector<1x128x128xf32>
    %11 = vector.shape_cast %10 : vector<1x128x128xf32> to vector<128x128xf32>
    %cst_10 = arith.constant dense<0.000000e+00> : vector<16x128xf32>
    %12 = tpu.matmul %9, %11, %cst_10 {dimension_numbers = #tpu.dot_dimension_numbers<[1], [0], [0], [1], [0, 0, 1, 1], [], []>} : vector<16x128xf32>, vector<128x128xf32>, vector<16x128xf32> -> vector<16x128xf32>
    %c1_11 = arith.constant 1 : index
    %c0_12 = arith.constant 0 : index
    %c0_13 = arith.constant 0 : index
    %13 = vector.load %arg3[%c1_11, %c0_12, %c0_13] : memref<4x1x128xf32, #tpu.memory_space<vmem>>, vector<1x1x128xf32>
    %14 = vector.shape_cast %13 : vector<1x1x128xf32> to vector<1x128xf32>
    %15 = vector.broadcast %14 : vector<1x128xf32> to vector<16x128xf32>
    %16 = arith.addf %12, %15 : vector<16x128xf32>
    %cst_14 = arith.constant 0.000000e+00 : f32
    %17 = vector.broadcast %cst_14 : f32 to vector<16x128xf32>
    %18 = arith.maximumf %16, %17 : vector<16x128xf32>
    %c2 = arith.constant 2 : index
    %c0_15 = arith.constant 0 : index
    %c0_16 = arith.constant 0 : index
    %19 = vector.load %arg2[%c2, %c0_15, %c0_16] : memref<4x128x128xf32, #tpu.memory_space<vmem>>, vector<1x128x128xf32>
    %20 = vector.shape_cast %19 : vector<1x128x128xf32> to vector<128x128xf32>
    %cst_17 = arith.constant dense<0.000000e+00> : vector<16x128xf32>
    %21 = tpu.matmul %18, %20, %cst_17 {dimension_numbers = #tpu.dot_dimension_numbers<[1], [0], [0], [1], [0, 0, 1, 1], [], []>} : vector<16x128xf32>, vector<128x128xf32>, vector<16x128xf32> -> vector<16x128xf32>
    %c2_18 = arith.constant 2 : index
    %c0_19 = arith.constant 0 : index
    %c0_20 = arith.constant 0 : index
    %22 = vector.load %arg3[%c2_18, %c0_19, %c0_20] : memref<4x1x128xf32, #tpu.memory_space<vmem>>, vector<1x1x128xf32>
    %23 = vector.shape_cast %22 : vector<1x1x128xf32> to vector<1x128xf32>
    %24 = vector.broadcast %23 : vector<1x128xf32> to vector<16x128xf32>
    %25 = arith.addf %21, %24 : vector<16x128xf32>
    %26 = tpu.iota {dimensions = array<i32: 1>} : vector<16x128xi32>
    %c64_i32 = arith.constant 64 : i32
    %27 = vector.broadcast %c64_i32 : i32 to vector<16x128xi32>
    %28 = arith.cmpi sge, %26, %27 : vector<16x128xi32>
    %cst_21 = arith.constant 0.000000e+00 : f32
    %29 = vector.broadcast %cst_21 : f32 to vector<16x128xf32>
    %30 = arith.maximumf %25, %29 : vector<16x128xf32>
    %31 = arith.select %28, %30, %25 : vector<16x128xi1>, vector<16x128xf32>
    %c3 = arith.constant 3 : index
    %c0_22 = arith.constant 0 : index
    %c0_23 = arith.constant 0 : index
    %32 = vector.load %arg2[%c3, %c0_22, %c0_23] : memref<4x128x128xf32, #tpu.memory_space<vmem>>, vector<1x128x128xf32>
    %33 = vector.shape_cast %32 : vector<1x128x128xf32> to vector<128x128xf32>
    %cst_24 = arith.constant dense<0.000000e+00> : vector<16x128xf32>
    %34 = tpu.matmul %31, %33, %cst_24 {dimension_numbers = #tpu.dot_dimension_numbers<[1], [0], [0], [1], [0, 0, 1, 1], [], []>} : vector<16x128xf32>, vector<128x128xf32>, vector<16x128xf32> -> vector<16x128xf32>
    %c3_25 = arith.constant 3 : index
    %c0_26 = arith.constant 0 : index
    %c0_27 = arith.constant 0 : index
    %35 = vector.load %arg3[%c3_25, %c0_26, %c0_27] : memref<4x1x128xf32, #tpu.memory_space<vmem>>, vector<1x1x128xf32>
    %36 = vector.shape_cast %35 : vector<1x1x128xf32> to vector<1x128xf32>
    %37 = vector.broadcast %36 : vector<1x128xf32> to vector<16x128xf32>
    %38 = arith.addf %34, %37 : vector<16x128xf32>
    %c0_28 = arith.constant 0 : index
    %c0_29 = arith.constant 0 : index
    %39 = vector.load %arg4[%c0_28, %c0_29] : memref<16x128xf32, #tpu.memory_space<vmem>>, vector<16x128xf32>
    tpu.vector_store %arg4[%c0_28, %c0_29], %38 {strides = array<i32>} : memref<16x128xf32, #tpu.memory_space<vmem>>, vector<16x128xf32>,
    return
  }
  func.func @transform_0(%arg0: i32) -> (i32, i32) {
    %c0_i32 = arith.constant 0 : i32
    %c0_i32_0 = arith.constant 0 : i32
    return %arg0, %c0_i32 : i32, i32
  }
  func.func @transform_1(%arg0: i32) -> (i32, i32, i32) {
    %c0_i32 = arith.constant 0 : i32
    %c0_i32_0 = arith.constant 0 : i32
    %c0_i32_1 = arith.constant 0 : i32
    %c0_i32_2 = arith.constant 0 : i32
    return %c0_i32, %c0_i32_0, %c0_i32_1 : i32, i32, i32
  }
  func.func @transform_2(%arg0: i32) -> (i32, i32, i32) {
    %c0_i32 = arith.constant 0 : i32
    %c0_i32_0 = arith.constant 0 : i32
    %c0_i32_1 = arith.constant 0 : i32
    %c0_i32_2 = arith.constant 0 : i32
    return %c0_i32, %c0_i32_0, %c0_i32_1 : i32, i32, i32
  }
  func.func @transform_3(%arg0: i32) -> (i32, i32) {
    %c0_i32 = arith.constant 0 : i32
    %c0_i32_0 = arith.constant 0 : i32
    return %arg0, %c0_i32 : i32, i32
  }
}

</mosaic_0001>

<llo_original>
// kernel: actor_critic_forward.1
$region0: #{actor_critic_forward.1}
  #allocation0 [shape = 'u32[]', space=smem, size = 0x4, offset = 0x4, fixed_abs, tag = 'smem constant byte address 0x4 - core index']
  #allocation1 [shape = 'u32[144,128]{1,0:T(1,128)}', space=vmem, size = 0x12000, scoped, tag = 'internal scratch']
  %s0 = inlined_call_operand.vmem [shape: f32[16,128], index: 0, kind: input, shape index: {}]
  %s1 = inlined_call_operand.hbm [shape: f32[4,128,128], index: 1, kind: input, shape index: {}]
  %s2 = inlined_call_operand.vmem [shape: f32[4,1,128], index: 2, kind: input, shape index: {}]
  %s3 = inlined_call_operand.vmem [shape: f32[16,128], index: 3, kind: output, shape index: {}]
  %s4 = sld [smem:[#allocation0]]
  $region26: #{actor_critic_forward.1} parent=0
    _
  %s6 = ssub.s32 1, %s4
  %s7 = scalar_select 0, %s6, %s4
  $region1: #{actor_critic_forward.1} parent=0
    #allocation2 [shape = 'u8[262144]{0}', space=vmem, size = 0x40000, scoped, tag = 'input window, operand 1, single buffered']
    #allocation3 [shape = 's32[1]{0}', space=sflag, size = 0x4, scoped, tag = 'scoped memory for actor_critic_forward.1']
    %8 = vsyncpa [#allocation3], 0
    // Predicated region
    $region2: #{actor_critic_forward.1} parent=1 // pred_check
      _
    $region3: #{actor_critic_forward.1} parent=1 // pred_check_branch
      %10 = sbr.rel (0) target = $region5
    $region4: #{actor_critic_forward.1} parent=1 // pred_region
      _
    $region5: #{actor_critic_forward.1} parent=1 // pred_fallthru
      _
    // Predicated region
    $region6: #{actor_critic_forward.1} parent=1 // pred_check
      _
    $region7: #{actor_critic_forward.1} parent=1 // pred_check_branch
      %12 = sbr.rel (0) target = $region9
    $region8: #{actor_critic_forward.1} parent=1 // pred_region
      %s14 = ssub.s32 8192, 8192
      %15 = vsyncadd [#allocation3], %s14
      %s16 = sshll.u32 [#allocation2], 4
      %s17 = int_to_ptr.vmem [resolvable:$true] %s16
      %22 = dma.hbm_to_vmem [thread:$0]  %s1, 8192, %s17, [#allocation3], 128, 128, 8
    $region9: #{actor_critic_forward.1} parent=1 // pred_fallthru
      _
    // Predicated region
    $region10: #{actor_critic_forward.1} parent=1 // pred_check
      _
    $region11: #{actor_critic_forward.1} parent=1 // pred_check_branch
      %24 = sbr.rel (0) target = $region13
    $region12: #{actor_critic_forward.1} parent=1 // pred_region
      _
    $region13: #{actor_critic_forward.1} parent=1 // pred_fallthru
      _
    // Predicated region
    $region14: #{actor_critic_forward.1} parent=1 // pred_check
      _
    $region15: #{actor_critic_forward.1} parent=1 // pred_check_branch
      %26 = sbr.rel (0) target = $region17
    $region16: #{actor_critic_forward.1} parent=1 // pred_region
      %27 = dma.done [#allocation3], 8192
    $region17: #{actor_critic_forward.1} parent=1 // pred_fallthru
      _
    %v28 = vld [vmem:[%s0] sm:$0xff]
    %v29 = vld [vmem:[%s0 + $0x8] sm:$0xff]
    %v30 = vld [vmem:[#allocation2] sm:$0xff]
    %v31 = vld [vmem:[#allocation2 + $0x8] sm:$0xff]
    %v32 = vld [vmem:[#allocation2 + $0x10] sm:$0xff]
    %v33 = vld [vmem:[#allocation2 + $0x18] sm:$0xff]
    %v34 = vld [vmem:[#allocation2 + $0x20] sm:$0xff]
    %v35 = vld [vmem:[#allocation2 + $0x28] sm:$0xff]
    %v36 = vld [vmem:[#allocation2 + $0x30] sm:$0xff]
    %v37 = vld [vmem:[#allocation2 + $0x38] sm:$0xff]
    %v38 = vld [vmem:[#allocation2 + $0x40] sm:$0xff]
    %v39 = vld [vmem:[#allocation2 + $0x48] sm:$0xff]
    %v40 = vld [vmem:[#allocation2 + $0x50] sm:$0xff]
    %v41 = vld [vmem:[#allocation2 + $0x58] sm:$0xff]
    %v42 = vld [vmem:[#allocation2 + $0x60] sm:$0xff]
    %v43 = vld [vmem:[#allocation2 + $0x68] sm:$0xff]
    %v44 = vld [vmem:[#allocation2 + $0x70] sm:$0xff]
    %v45 = vld [vmem:[#allocation2 + $0x78] sm:$0xff]
    %v46 = vld [vmem:[%s2] sm:$0x1]
    %v48 = vlaneseq
    %v49 = vshrl.u32 %v48, 7
    %v50 = vsub.s32 0, %v49
    %v51 = vrot.slane %v46, %v50
    %53 = vmatprep.subr.mxu0 0.0
    %54 = vmatpush1.msra.mxu0 %v30
    %55 = vmatprep.subr.mxu0 0.0
    %56 = vmatpush1.msra.mxu0 %v31
    %57 = vmatprep.subr.mxu0 0.0
    %58 = vmatpush1.msra.mxu0 %v32
    %59 = vmatprep.subr.mxu0 0.0
    %60 = vmatpush1.msra.mxu0 %v33
    %61 = vmatprep.subr.mxu0 0.0
    %62 = vmatpush1.msra.mxu0 %v34
    %63 = vmatprep.subr.mxu0 0.0
    %64 = vmatpush1.msra.mxu0 %v35
    %65 = vmatprep.subr.mxu0 0.0
    %66 = vmatpush1.msra.mxu0 %v36
    %67 = vmatprep.subr.mxu0 0.0
    %68 = vmatpush1.msra.mxu0 %v37
    %69 = vmatprep.subr.mxu0 0.0
    %70 = vmatpush1.msra.mxu0 %v38
    %71 = vmatprep.subr.mxu0 0.0
    %72 = vmatpush1.msra.mxu0 %v39
    %73 = vmatprep.subr.mxu0 0.0
    %74 = vmatpush1.msra.mxu0 %v40
    %75 = vmatprep.subr.mxu0 0.0
    %76 = vmatpush1.msra.mxu0 %v41
    %77 = vmatprep.subr.mxu0 0.0
    %78 = vmatpush1.msra.mxu0 %v42
    %79 = vmatprep.subr.mxu0 0.0
    %80 = vmatpush1.msra.mxu0 %v43
    %81 = vmatprep.subr.mxu0 0.0
    %82 = vmatpush1.msra.mxu0 %v44
    %83 = vmatprep.subr.mxu0 0.0
    %84 = vmatpush1.msra.mxu0 %v45
    %85 = vmatprep.subr.mxu0 0.0
    %86 = vmatpush1.msra.mxu0 0.0
    %87 = vmatprep.subr.mxu0 0.0
    %88 = vmatpush1.msra.mxu0 0.0
    %89 = vmatprep.subr.mxu0 0.0
    %90 = vmatpush1.msra.mxu0 0.0
    %91 = vmatprep.subr.mxu0 0.0
    %92 = vmatpush1.msra.mxu0 0.0
    %93 = vmatprep.subr.mxu0 0.0
    %94 = vmatpush1.msra.mxu0 0.0
    %95 = vmatprep.subr.mxu0 0.0
    %96 = vmatpush1.msra.mxu0 0.0
    %97 = vmatprep.subr.mxu0 0.0
    %98 = vmatpush1.msra.mxu0 0.0
    %99 = vmatprep.subr.mxu0 0.0
    %100 = vmatpush1.msra.mxu0 0.0
    %101 = vmatprep.subr.mxu0 0.0
    %102 = vmatpush1.msra.mxu0 0.0
    %103 = vmatprep.subr.mxu0 0.0
    %104 = vmatpush1.msra.mxu0 0.0
    %105 = vmatprep.subr.mxu0 0.0
    %106 = vmatpush1.msra.mxu0 0.0
    %107 = vmatprep.subr.mxu0 0.0
    %108 = vmatpush1.msra.mxu0 0.0
    %109 = vmatprep.subr.mxu0 0.0
    %110 = vmatpush1.msra.mxu0 0.0
    %111 = vmatprep.subr.mxu0 0.0
    %112 = vmatpush1.msra.mxu0 0.0
    %113 = vmatprep.subr.mxu0 0.0
    %114 = vmatpush1.msra.mxu0 0.0
    %115 = vmatprep.subr.mxu0 0.0
    %116 = vmatpush1.msra.mxu0 0.0
    %117 = vmatprep.mubr.f32.mxu0 0.0
    %118 = vmatmul.mubr.f32.gmra.mrb[0].mxu0 %v28
    %v119 = vpop.f32.mrb[0].mxu0
    %v120 = vadd.f32 %v51, %v119
    %v121 = vpop.f32.mrb[0].mxu0
    %122 = vmatprep.mubr.f32.mxu0 0.0
    %123 = vmatmul.mubr.f32.gmra.mrb[0].mxu0 %v29
    %v124 = vpop.f32.mrb[0].mxu0
    %v125 = vadd.f32 %v51, %v124
    %v126 = vpop.f32.mrb[0].mxu0
    %127 = vdwg.mxu0
    %v128 = vmax.f32 %v120, 0.0
    %v129 = vmax.f32 %v125, 0.0
    %s130 = scalar_lea.vmem [#allocation2], 128
    %v131 = vld [vmem:[%s130] sm:$0xff]
    %v132 = vld [vmem:[%s130 + $0x8] sm:$0xff]
    %v133 = vld [vmem:[%s130 + $0x10] sm:$0xff]
    %v134 = vld [vmem:[%s130 + $0x18] sm:$0xff]
    %v135 = vld [vmem:[%s130 + $0x20] sm:$0xff]
    %v136 = vld [vmem:[%s130 + $0x28] sm:$0xff]
    %v137 = vld [vmem:[%s130 + $0x30] sm:$0xff]
    %v138 = vld [vmem:[%s130 + $0x38] sm:$0xff]
    %v139 = vld [vmem:[%s130 + $0x40] sm:$0xff]
    %v140 = vld [vmem:[%s130 + $0x48] sm:$0xff]
    %v141 = vld [vmem:[%s130 + $0x50] sm:$0xff]
    %v142 = vld [vmem:[%s130 + $0x58] sm:$0xff]
    %v143 = vld [vmem:[%s130 + $0x60] sm:$0xff]
    %v144 = vld [vmem:[%s130 + $0x68] sm:$0xff]
    %v145 = vld [vmem:[%s130 + $0x70] sm:$0xff]
    %v146 = vld [vmem:[%s130 + $0x78] sm:$0xff]
    %s147 = scalar_lea.vmem %s2, 1
    %v148 = vld [vmem:[%s147] sm:$0x1]
    %v150 = vlaneseq
    %v151 = vshrl.u32 %v150, 7
    %v152 = vsub.s32 0, %v151
    %v153 = vrot.slane %v148, %v152
    %155 = vmatprep.subr.mxu0 0.0
    %156 = vmatpush1.msra.mxu0 %v131
    %157 = vmatprep.subr.mxu0 0.0
    %158 = vmatpush1.msra.mxu0 %v132
    %159 = vmatprep.subr.mxu0 0.0
    %160 = vmatpush1.msra.mxu0 %v133
    %161 = vmatprep.subr.mxu0 0.0
    %162 = vmatpush1.msra.mxu0 %v134
    %163 = vmatprep.subr.mxu0 0.0
    %164 = vmatpush1.msra.mxu0 %v135
    %165 = vmatprep.subr.mxu0 0.0
    %166 = vmatpush1.msra.mxu0 %v136
    %167 = vmatprep.subr.mxu0 0.0
    %168 = vmatpush1.msra.mxu0 %v137
    %169 = vmatprep.subr.mxu0 0.0
    %170 = vmatpush1.msra.mxu0 %v138
    %171 = vmatprep.subr.mxu0 0.0
    %172 = vmatpush1.msra.mxu0 %v139
    %173 = vmatprep.subr.mxu0 0.0
    %174 = vmatpush1.msra.mxu0 %v140
    %175 = vmatprep.subr.mxu0 0.0
    %176 = vmatpush1.msra.mxu0 %v141
    %177 = vmatprep.subr.mxu0 0.0
    %178 = vmatpush1.msra.mxu0 %v142
    %179 = vmatprep.subr.mxu0 0.0
    %180 = vmatpush1.msra.mxu0 %v143
    %181 = vmatprep.subr.mxu0 0.0
    %182 = vmatpush1.msra.mxu0 %v144
    %183 = vmatprep.subr.mxu0 0.0
    %184 = vmatpush1.msra.mxu0 %v145
    %185 = vmatprep.subr.mxu0 0.0
    %186 = vmatpush1.msra.mxu0 %v146
    %187 = vmatprep.subr.mxu0 0.0
    %188 = vmatpush1.msra.mxu0 0.0
    %189 = vmatprep.subr.mxu0 0.0
    %190 = vmatpush1.msra.mxu0 0.0
    %191 = vmatprep.subr.mxu0 0.0
    %192 = vmatpush1.msra.mxu0 0.0
    %193 = vmatprep.subr.mxu0 0.0
    %194 = vmatpush1.msra.mxu0 0.0
    %195 = vmatprep.subr.mxu0 0.0
    %196 = vmatpush1.msra.mxu0 0.0
    %197 = vmatprep.subr.mxu0 0.0
    %198 = vmatpush1.msra.mxu0 0.0
    %199 = vmatprep.subr.mxu0 0.0
    %200 = vmatpush1.msra.mxu0 0.0
    %201 = vmatprep.subr.mxu0 0.0
    %202 = vmatpush1.msra.mxu0 0.0
    %203 = vmatprep.subr.mxu0 0.0
    %204 = vmatpush1.msra.mxu0 0.0
    %205 = vmatprep.subr.mxu0 0.0
    %206 = vmatpush1.msra.mxu0 0.0
    %207 = vmatprep.subr.mxu0 0.0
    %208 = vmatpush1.msra.mxu0 0.0
    %209 = vmatprep.subr.mxu0 0.0
    %210 = vmatpush1.msra.mxu0 0.0
    %211 = vmatprep.subr.mxu0 0.0
    %212 = vmatpush1.msra.mxu0 0.0
    %213 = vmatprep.subr.mxu0 0.0
    %214 = vmatpush1.msra.mxu0 0.0
    %215 = vmatprep.subr.mxu0 0.0
    %216 = vmatpush1.msra.mxu0 0.0
    %217 = vmatprep.subr.mxu0 0.0
    %218 = vmatpush1.msra.mxu0 0.0
    %219 = vmatprep.mubr.f32.mxu0 0.0
    %220 = vmatmul.mubr.f32.gmra.mrb[0].mxu0 %v128
    %v221 = vpop.f32.mrb[0].mxu0
    %v222 = vadd.f32 %v153, %v221
    %v223 = vpop.f32.mrb[0].mxu0
    %224 = vmatprep.mubr.f32.mxu0 0.0
    %225 = vmatmul.mubr.f32.gmra.mrb[0].mxu0 %v129
    %v226 = vpop.f32.mrb[0].mxu0
    %v227 = vadd.f32 %v153, %v226
    %v228 = vpop.f32.mrb[0].mxu0
    %229 = vdwg.mxu0
    %v230 = vmax.f32 %v222, 0.0
    %v231 = vmax.f32 %v227, 0.0
    %s232 = scalar_lea.vmem [#allocation2], 256
    %v233 = vld [vmem:[%s232] sm:$0xff]
    %v234 = vld [vmem:[%s232 + $0x8] sm:$0xff]
    %v235 = vld [vmem:[%s232 + $0x10] sm:$0xff]
    %v236 = vld [vmem:[%s232 + $0x18] sm:$0xff]
    %v237 = vld [vmem:[%s232 + $0x20] sm:$0xff]
    %v238 = vld [vmem:[%s232 + $0x28] sm:$0xff]
    %v239 = vld [vmem:[%s232 + $0x30] sm:$0xff]
    %v240 = vld [vmem:[%s232 + $0x38] sm:$0xff]
    %v241 = vld [vmem:[%s232 + $0x40] sm:$0xff]
    %v242 = vld [vmem:[%s232 + $0x48] sm:$0xff]
    %v243 = vld [vmem:[%s232 + $0x50] sm:$0xff]
    %v244 = vld [vmem:[%s232 + $0x58] sm:$0xff]
    %v245 = vld [vmem:[%s232 + $0x60] sm:$0xff]
    %v246 = vld [vmem:[%s232 + $0x68] sm:$0xff]
    %v247 = vld [vmem:[%s232 + $0x70] sm:$0xff]
    %v248 = vld [vmem:[%s232 + $0x78] sm:$0xff]
    %s249 = scalar_lea.vmem %s2, 2
    %v250 = vld [vmem:[%s249] sm:$0x1]
    %v252 = vlaneseq
    %v253 = vshrl.u32 %v252, 7
    %v254 = vsub.s32 0, %v253
    %v255 = vrot.slane %v250, %v254
    %257 = vmatprep.subr.mxu0 0.0
    %258 = vmatpush1.msra.mxu0 %v233
    %259 = vmatprep.subr.mxu0 0.0
    %260 = vmatpush1.msra.mxu0 %v234
    %261 = vmatprep.subr.mxu0 0.0
    %262 = vmatpush1.msra.mxu0 %v235
    %263 = vmatprep.subr.mxu0 0.0
    %264 = vmatpush1.msra.mxu0 %v236
    %265 = vmatprep.subr.mxu0 0.0
    %266 = vmatpush1.msra.mxu0 %v237
    %267 = vmatprep.subr.mxu0 0.0
    %268 = vmatpush1.msra.mxu0 %v238
    %269 = vmatprep.subr.mxu0 0.0
    %270 = vmatpush1.msra.mxu0 %v239
    %271 = vmatprep.subr.mxu0 0.0
    %272 = vmatpush1.msra.mxu0 %v240
    %273 = vmatprep.subr.mxu0 0.0
    %274 = vmatpush1.msra.mxu0 %v241
    %275 = vmatprep.subr.mxu0 0.0
    %276 = vmatpush1.msra.mxu0 %v242
    %277 = vmatprep.subr.mxu0 0.0
    %278 = vmatpush1.msra.mxu0 %v243
    %279 = vmatprep.subr.mxu0 0.0
    %280 = vmatpush1.msra.mxu0 %v244
    %281 = vmatprep.subr.mxu0 0.0
    %282 = vmatpush1.msra.mxu0 %v245
    %283 = vmatprep.subr.mxu0 0.0
    %284 = vmatpush1.msra.mxu0 %v246
    %285 = vmatprep.subr.mxu0 0.0
    %286 = vmatpush1.msra.mxu0 %v247
    %287 = vmatprep.subr.mxu0 0.0
    %288 = vmatpush1.msra.mxu0 %v248
    %289 = vmatprep.subr.mxu0 0.0
    %290 = vmatpush1.msra.mxu0 0.0
    %291 = vmatprep.subr.mxu0 0.0
    %292 = vmatpush1.msra.mxu0 0.0
    %293 = vmatprep.subr.mxu0 0.0
    %294 = vmatpush1.msra.mxu0 0.0
    %295 = vmatprep.subr.mxu0 0.0
    %296 = vmatpush1.msra.mxu0 0.0
    %297 = vmatprep.subr.mxu0 0.0
    %298 = vmatpush1.msra.mxu0 0.0
    %299 = vmatprep.subr.mxu0 0.0
    %300 = vmatpush1.msra.mxu0 0.0
    %301 = vmatprep.subr.mxu0 0.0
    %302 = vmatpush1.msra.mxu0 0.0
    %303 = vmatprep.subr.mxu0 0.0
    %304 = vmatpush1.msra.mxu0 0.0
    %305 = vmatprep.subr.mxu0 0.0
    %306 = vmatpush1.msra.mxu0 0.0
    %307 = vmatprep.subr.mxu0 0.0
    %308 = vmatpush1.msra.mxu0 0.0
    %309 = vmatprep.subr.mxu0 0.0
    %310 = vmatpush1.msra.mxu0 0.0
    %311 = vmatprep.subr.mxu0 0.0
    %312 = vmatpush1.msra.mxu0 0.0
    %313 = vmatprep.subr.mxu0 0.0
    %314 = vmatpush1.msra.mxu0 0.0
    %315 = vmatprep.subr.mxu0 0.0
    %316 = vmatpush1.msra.mxu0 0.0
    %317 = vmatprep.subr.mxu0 0.0
    %318 = vmatpush1.msra.mxu0 0.0
    %319 = vmatprep.subr.mxu0 0.0
    %320 = vmatpush1.msra.mxu0 0.0
    %321 = vmatprep.mubr.f32.mxu0 0.0
    %322 = vmatmul.mubr.f32.gmra.mrb[0].mxu0 %v230
    %v323 = vpop.f32.mrb[0].mxu0
    %v324 = vadd.f32 %v255, %v323
    %v325 = vpop.f32.mrb[0].mxu0
    %326 = vmatprep.mubr.f32.mxu0 0.0
    %327 = vmatmul.mubr.f32.gmra.mrb[0].mxu0 %v231
    %v328 = vpop.f32.mrb[0].mxu0
    %v329 = vadd.f32 %v255, %v328
    %v330 = vpop.f32.mrb[0].mxu0
    %331 = vdwg.mxu0
    %v332 = vlaneseq
    %v333 = vand.u32 %v332, 127
    %vm334 = vcmp.ge.s32.totalorder %v333, 64
    %v335 = vmax.f32 %v324, 0.0
    %v336 = vmax.f32 %v329, 0.0
    %v337 = vsel %vm334, %v335, %v324
    %v338 = vsel %vm334, %v336, %v329
    %s339 = scalar_lea.vmem [#allocation2], 384
    %v340 = vld [vmem:[%s339] sm:$0xff]
    %v341 = vld [vmem:[%s339 + $0x8] sm:$0xff]
    %v342 = vld [vmem:[%s339 + $0x10] sm:$0xff]
    %v343 = vld [vmem:[%s339 + $0x18] sm:$0xff]
    %v344 = vld [vmem:[%s339 + $0x20] sm:$0xff]
    %v345 = vld [vmem:[%s339 + $0x28] sm:$0xff]
    %v346 = vld [vmem:[%s339 + $0x30] sm:$0xff]
    %v347 = vld [vmem:[%s339 + $0x38] sm:$0xff]
    %v348 = vld [vmem:[%s339 + $0x40] sm:$0xff]
    %v349 = vld [vmem:[%s339 + $0x48] sm:$0xff]
    %v350 = vld [vmem:[%s339 + $0x50] sm:$0xff]
    %v351 = vld [vmem:[%s339 + $0x58] sm:$0xff]
    %v352 = vld [vmem:[%s339 + $0x60] sm:$0xff]
    %v353 = vld [vmem:[%s339 + $0x68] sm:$0xff]
    %v354 = vld [vmem:[%s339 + $0x70] sm:$0xff]
    %v355 = vld [vmem:[%s339 + $0x78] sm:$0xff]
    %s356 = scalar_lea.vmem %s2, 3
    %v357 = vld [vmem:[%s356] sm:$0x1]
    %v359 = vlaneseq
    %v360 = vshrl.u32 %v359, 7
    %v361 = vsub.s32 0, %v360
    %v362 = vrot.slane %v357, %v361
    %364 = vmatprep.subr.mxu0 0.0
    %365 = vmatpush1.msra.mxu0 %v340
    %366 = vmatprep.subr.mxu0 0.0
    %367 = vmatpush1.msra.mxu0 %v341
    %368 = vmatprep.subr.mxu0 0.0
    %369 = vmatpush1.msra.mxu0 %v342
    %370 = vmatprep.subr.mxu0 0.0
    %371 = vmatpush1.msra.mxu0 %v343
    %372 = vmatprep.subr.mxu0 0.0
    %373 = vmatpush1.msra.mxu0 %v344
    %374 = vmatprep.subr.mxu0 0.0
    %375 = vmatpush1.msra.mxu0 %v345
    %376 = vmatprep.subr.mxu0 0.0
    %377 = vmatpush1.msra.mxu0 %v346
    %378 = vmatprep.subr.mxu0 0.0
    %379 = vmatpush1.msra.mxu0 %v347
    %380 = vmatprep.subr.mxu0 0.0
    %381 = vmatpush1.msra.mxu0 %v348
    %382 = vmatprep.subr.mxu0 0.0
    %383 = vmatpush1.msra.mxu0 %v349
    %384 = vmatprep.subr.mxu0 0.0
    %385 = vmatpush1.msra.mxu0 %v350
    %386 = vmatprep.subr.mxu0 0.0
    %387 = vmatpush1.msra.mxu0 %v351
    %388 = vmatprep.subr.mxu0 0.0
    %389 = vmatpush1.msra.mxu0 %v352
    %390 = vmatprep.subr.mxu0 0.0
    %391 = vmatpush1.msra.mxu0 %v353
    %392 = vmatprep.subr.mxu0 0.0
    %393 = vmatpush1.msra.mxu0 %v354
    %394 = vmatprep.subr.mxu0 0.0
    %395 = vmatpush1.msra.mxu0 %v355
    %396 = vmatprep.subr.mxu0 0.0
    %397 = vmatpush1.msra.mxu0 0.0
    %398 = vmatprep.subr.mxu0 0.0
    %399 = vmatpush1.msra.mxu0 0.0
    %400 = vmatprep.subr.mxu0 0.0
    %401 = vmatpush1.msra.mxu0 0.0
    %402 = vmatprep.subr.mxu0 0.0
    %403 = vmatpush1.msra.mxu0 0.0
    %404 = vmatprep.subr.mxu0 0.0
    %405 = vmatpush1.msra.mxu0 0.0
    %406 = vmatprep.subr.mxu0 0.0
    %407 = vmatpush1.msra.mxu0 0.0
    %408 = vmatprep.subr.mxu0 0.0
    %409 = vmatpush1.msra.mxu0 0.0
    %410 = vmatprep.subr.mxu0 0.0
    %411 = vmatpush1.msra.mxu0 0.0
    %412 = vmatprep.subr.mxu0 0.0
    %413 = vmatpush1.msra.mxu0 0.0
    %414 = vmatprep.subr.mxu0 0.0
    %415 = vmatpush1.msra.mxu0 0.0
    %416 = vmatprep.subr.mxu0 0.0
    %417 = vmatpush1.msra.mxu0 0.0
    %418 = vmatprep.subr.mxu0 0.0
    %419 = vmatpush1.msra.mxu0 0.0
    %420 = vmatprep.subr.mxu0 0.0
    %421 = vmatpush1.msra.mxu0 0.0
    %422 = vmatprep.subr.mxu0 0.0
    %423 = vmatpush1.msra.mxu0 0.0
    %424 = vmatprep.subr.mxu0 0.0
    %425 = vmatpush1.msra.mxu0 0.0
    %426 = vmatprep.subr.mxu0 0.0
    %427 = vmatpush1.msra.mxu0 0.0
    %428 = vmatprep.mubr.f32.mxu0 0.0
    %429 = vmatmul.mubr.f32.gmra.mrb[0].mxu0 %v337
    %v430 = vpop.f32.mrb[0].mxu0
    %v431 = vadd.f32 %v362, %v430
    %v432 = vpop.f32.mrb[0].mxu0
    %433 = vmatprep.mubr.f32.mxu0 0.0
    %434 = vmatmul.mubr.f32.gmra.mrb[0].mxu0 %v338
    %v435 = vpop.f32.mrb[0].mxu0
    %v436 = vadd.f32 %v362, %v435
    %v437 = vpop.f32.mrb[0].mxu0
    %438 = vdwg.mxu0
    %439 = vst [vmem:[%s3] sm:$0xff] %v431
    %440 = vst [vmem:[%s3 + $0x8] sm:$0xff] %v436
    // Predicated region
    $region18: #{actor_critic_forward.1} parent=1 // pred_check
      _
    $region19: #{actor_critic_forward.1} parent=1 // pred_check_branch
      %442 = sbr.rel (0) target = $region21
    $region20: #{actor_critic_forward.1} parent=1 // pred_region
      _
    $region21: #{actor_critic_forward.1} parent=1 // pred_fallthru
      _
    // Predicated region
    $region22: #{actor_critic_forward.1} parent=1 // pred_check
      _
    $region23: #{actor_critic_forward.1} parent=1 // pred_check_branch
      %444 = sbr.rel (0) target = $region25
    $region24: #{actor_critic_forward.1} parent=1 // pred_region
      _
    $region25: #{actor_critic_forward.1} parent=1 // pred_fallthru
      _
    %445 = vsyncpa [#allocation3], 1

</llo_original>
